<compile_context>
chip_gen: v6e
topology: v6e:2x2x1
jax: 0.10.0
libtpu: 0.0.40
codegen_flags: <defaults>
</compile_context>

<pallas_src>
import jax
import jax.numpy as jnp
from jax.experimental import pallas as pl
from jax.experimental.pallas import tpu as pltpu


# ----------------------------------------------------------------------------
# Kernel: one grid step copies a (rt, L) input slab into every repeat slot of
# the (repeats, rt, L) output block.  The channel repeat is expressed entirely
# here + in the output BlockSpec; each input byte is read from HBM exactly once.
# ----------------------------------------------------------------------------
def _skip_kernel(x_ref, o_ref):
    # x_ref: (rt, L)   o_ref: (repeats, rt, L)
    for rep in range(o_ref.shape[0]):   # static unroll; pure VMEM->VMEM copies
        o_ref[rep] = x_ref[...]


def _choose_view(C_in, HW):
    """Factor the per-batch element count S = C_in*HW into a dense (R, L) view.

    L is the lane (last) dim: prefer a 512/256/128 divisor so stores are
    unmasked full-width vst and vregs are fully packed regardless of C_in.
    """
    S = C_in * HW
    for L in (512, 256, 128):
        if S % L == 0:
            return S // L, L
    # No 128-aligned divisor: keep the natural (C_in, HW) layout.  Stores may
    # be masked (vst.msk) but remain correct.
    return C_in, HW


def _pick_row_tile(R, L, repeats, itemsize, budget_bytes=12 << 20):
    """Rows per grid step so double-buffered (in + repeats*out) blocks fit."""
    denom = 2 * (1 + repeats) * L * itemsize      # double-buffer * (in + out)
    rt = min(R, max(1, budget_bytes // denom))
    if rt < R:
        # Partial tiling: keep the sublane dim a multiple of 8 so blocks stay
        # (8, 128)-aligned (a full-R block is always legal).
        rt = min(R, max(8, (rt // 8) * 8))
    return rt


def skip_forward(x_nchw, C_out, stride=1):
    """Pallas implementation of Skip.forward: x.repeat(1, C_out // C_in, 1, 1).

    `stride` is accepted for interface parity but unused, exactly like the
    PyTorch module's forward.
    """
    del stride
    N, C_in, H, W = x_nchw.shape
    assert C_out % C_in == 0, "C_out must be divisible by C_in"
    repeats = C_out // C_in

    if repeats == 1:
        # Identity repeat: no HBM traffic needed at all.
        return x_nchw

    HW = H * W
    R, L = _choose_view(C_in, HW)
    itemsize = jnp.dtype(x_nchw.dtype).itemsize
    rt = _pick_row_tile(R, L, repeats, itemsize)
    n_r = pl.cdiv(R, rt)

    # Free (row-major) reshape: per-batch payload folded into a dense 2-D slab.
    x3 = x_nchw.reshape(N, R, L)

    # Actual double-buffered VMEM requirement for this tiling; give 2x headroom
    # and clamp to a range safe on all generations (>= 16 MiB default, << 64 MiB
    # v7x physical).
    vmem_need = 2 * (1 + repeats) * rt * L * itemsize
    vmem_limit = int(min(max(2 * vmem_need, 16 << 20), 48 << 20))

    out = pl.pallas_call(
        _skip_kernel,
        out_shape=jax.ShapeDtypeStruct((N, repeats, R, L), x_nchw.dtype),
        grid=(N, n_r),
        in_specs=[
            # One input slab per (n, r); never re-read across repeat slots.
            pl.BlockSpec((None, rt, L), lambda n, r: (n, r, 0)),
        ],
        out_specs=pl.BlockSpec(
            # All repeat slots produced from the single in-VMEM input slab.
            (None, repeats, rt, L), lambda n, r: (n, 0, r, 0)
        ),
        compiler_params=pltpu.CompilerParams(
            dimension_semantics=("parallel", "parallel"),
            vmem_limit_bytes=vmem_limit,
        ),
    )(x3)

    # Free view change back to NCHW: (N, repeats, R, L) and (N, C_out, H, W)
    # share the same row-major byte layout since repeats*R*L == C_out*H*W and
    # each batch's output is `repeats` contiguous copies of its input slab.
    return out.reshape(N, C_out, H, W)


# ----------------------------------------------------------------------------
if __name__ == "__main__":
    key = jax.random.PRNGKey(0)

    N, C_in, C_out, H, W = 2, 4, 8, 16, 16
    stride = 1  # unused by Skip.forward; kept for interface parity

    x = jax.random.normal(key, (N, C_in, H, W), jnp.float32)

    y = skip_forward(x, C_out, stride)
    jax.block_until_ready(y)

    # Reference: PyTorch x.repeat(1, C_out // C_in, 1, 1) == jnp.tile over channels.
    ref = jnp.tile(x, (1, C_out // C_in, 1, 1))

    assert y.shape == (N, C_out, H, W), y.shape
    assert bool(jnp.array_equal(y, ref)), "mismatch vs channel-repeat reference"
    print("KERNEL_OK")
</pallas_src>

<mosaic_0001>
module attributes {stable_mosaic.version = 11 : i64} {
  func.func @_skip_kernel(%arg0: i32, %arg1: i32, %arg2: memref<1x2x512xf32, #tpu.memory_space<vmem>>, %arg3: memref<1x2x2x512xf32, #tpu.memory_space<vmem>>) attributes {dimension_semantics = [#tpu.dimension_semantics<parallel>, #tpu.dimension_semantics<parallel>], iteration_bounds = array<i64: 2, 1>, scalar_prefetch = 0 : i64, scratch_operands = 0 : i64, tpu.core_type = #tpu.core_type<tc>, window_params = [{transform_indices = @transform_0, window_bounds = array<i64: 1, 2, 512>}, {transform_indices = @transform_1, window_bounds = array<i64: 1, 2, 2, 512>}]} {
    %c0 = arith.constant 0 : index
    %c0_0 = arith.constant 0 : index
    %c0_1 = arith.constant 0 : index
    %0 = vector.load %arg2[%c0, %c0_0, %c0_1] : memref<1x2x512xf32, #tpu.memory_space<vmem>>, vector<1x2x512xf32>
    %1 = vector.shape_cast %0 : vector<1x2x512xf32> to vector<2x512xf32>
    %c0_2 = arith.constant 0 : index
    %c0_3 = arith.constant 0 : index
    %c0_4 = arith.constant 0 : index
    %c0_5 = arith.constant 0 : index
    %2 = vector.load %arg3[%c0_2, %c0_3, %c0_4, %c0_5] : memref<1x2x2x512xf32, #tpu.memory_space<vmem>>, vector<1x1x2x512xf32>
    %3 = vector.shape_cast %2 : vector<1x1x2x512xf32> to vector<2x512xf32>
    %4 = vector.shape_cast %1 : vector<2x512xf32> to vector<1x1x2x512xf32>
    tpu.vector_store %arg3[%c0_2, %c0_3, %c0_4, %c0_5], %4 {strides = array<i32>} : memref<1x2x2x512xf32, #tpu.memory_space<vmem>>, vector<1x1x2x512xf32>,
    %c0_6 = arith.constant 0 : index
    %c0_7 = arith.constant 0 : index
    %c0_8 = arith.constant 0 : index
    %5 = vector.load %arg2[%c0_6, %c0_7, %c0_8] : memref<1x2x512xf32, #tpu.memory_space<vmem>>, vector<1x2x512xf32>
    %6 = vector.shape_cast %5 : vector<1x2x512xf32> to vector<2x512xf32>
    %c0_9 = arith.constant 0 : index
    %c1 = arith.constant 1 : index
    %c0_10 = arith.constant 0 : index
    %c0_11 = arith.constant 0 : index
    %7 = vector.load %arg3[%c0_9, %c1, %c0_10, %c0_11] : memref<1x2x2x512xf32, #tpu.memory_space<vmem>>, vector<1x1x2x512xf32>
    %8 = vector.shape_cast %7 : vector<1x1x2x512xf32> to vector<2x512xf32>
    %9 = vector.shape_cast %6 : vector<2x512xf32> to vector<1x1x2x512xf32>
    tpu.vector_store %arg3[%c0_9, %c1, %c0_10, %c0_11], %9 {strides = array<i32>} : memref<1x2x2x512xf32, #tpu.memory_space<vmem>>, vector<1x1x2x512xf32>,
    return
  }
  func.func @transform_0(%arg0: i32, %arg1: i32) -> (i32, i32, i32) {
    %c0_i32 = arith.constant 0 : i32
    %c0_i32_0 = arith.constant 0 : i32
    return %arg0, %arg1, %c0_i32 : i32, i32, i32
  }
  func.func @transform_1(%arg0: i32, %arg1: i32) -> (i32, i32, i32, i32) {
    %c0_i32 = arith.constant 0 : i32
    %c0_i32_0 = arith.constant 0 : i32
    %c0_i32_1 = arith.constant 0 : i32
    return %arg0, %c0_i32, %arg1, %c0_i32_0 : i32, i32, i32, i32
  }
}

</mosaic_0001>

<llo_original>
// kernel: tpu_custom_call.1
$region0: #{tpu_custom_call.1}
  #allocation0 [shape = 'u32[]', space=smem, size = 0x4, offset = 0x4, fixed_abs, tag = 'smem constant byte address 0x4 - core index']
  #allocation1 [shape = 'u32[144,128]{1,0:T(1,128)}', space=vmem, size = 0x12000, scoped, tag = 'internal scratch']
  %s0 = inlined_call_operand.hbm [shape: f32[2,2,512], index: 0, kind: input, shape index: {}]
  %s1 = inlined_call_operand.hbm [shape: f32[2,2,2,512], index: 1, kind: output, shape index: {}]
  %s2 = sld [smem:[#allocation0]]
  $region41: #{tpu_custom_call.1} parent=0
    _
  %s4 = ssub.s32 1, %s2
  %s5 = scalar_select 0, %s4, %s2
  $region1: #{tpu_custom_call.1} parent=0
    #allocation2 [shape = 'u8[8192]{0}', space=vmem, size = 0x2000, scoped, tag = 'input window, operand 0']
    #allocation3 [shape = 's32[2]{0}', space=sflag, size = 0x8, scoped, tag = 'scoped memory for tpu_custom_call.1']
    #allocation4 [shape = 's32[2]{0}', space=sflag, size = 0x8, scoped, tag = 'scoped memory for tpu_custom_call.1']
    #allocation5 [shape = 'u8[16384]{0}', space=vmem, size = 0x4000, scoped, tag = 'output window, operand 0']
    %6 = vsyncpa [#allocation3], 0
    %s7 = scalar_lea.sflag [#allocation3], 1
    %8 = vsyncpa %s7, 0
    %9 = vsyncpa [#allocation4], 0
    %s10 = scalar_lea.sflag [#allocation4], 1
    %11 = vsyncpa %s10, 0
    loop: start=0, step=1, limit=4
    $region2: #{tpu_custom_call.1} parent=1 // loop_pre_header
      _
    $region3: #{tpu_custom_call.1} parent=1 // loop_header
      %s13 = sphi 0, %s17
      %p14 = scmp.ge.s32.totalorder %s13, 4
      %s20 = sphi 0, %s32
      %s21 = sphi 0, %s28
      %s22 = sphi 0, %s20
      %s23 = sphi 0, %s21
      %s24 = sphi 0, %s22
      %s25 = sphi 0, %s23
      %s37 = sphi 0, %s39
      %s40 = sphi 0, %s37
      %s41 = sphi 0, %s40
      %s57 = sphi 0, %s41
      %s65 = sphi 0, %s67
      %s68 = sphi 0, %s65
      %s69 = sphi 0, %s68
      %s85 = sphi 0, %s69
    $region4: #{tpu_custom_call.1} parent=1 // loop_header_branch
      %16 = sbr.rel (%p14) target = $region8
    $region5: #{tpu_custom_call.1} parent=1 // loop_body
      %s18 = ssub.s32 %s13, 1
      %s19 = ssub.s32 %s13, 2
      %s26 = sadd.s32 1, %s21
      %p27 = scmp.ge.s32.totalorder %s26, 1
      %s28 = scalar_select %p27, 0, %s26
      %s29 = sadd.s32 1, %s20
      %s30 = scalar_select %p27, %s29, %s20
      %p31 = scmp.ge.s32.totalorder %s30, 2
      %s32 = scalar_select %p31, 0, %s30
      %s33 = ssub.s32 %s20, %s32
      %s34 = ssub.s32 %s21, %s28
      %s35 = sor.u32 %s33, %s34
      %p36 = scmp.eq.s32.totalorder %s35, 0
      %s38 = sadd.s32 %s37, 1
      %s39 = scalar_select %p36, %s37, %s38
      %p42 = pneg %p36
      %p43 = scmp.eq.s32.totalorder %s13, 1
      %p44 = por %p42, %p43
      %p45 = scmp.ne.s32.totalorder %s37, %s40
      %p46 = scmp.eq.s32.totalorder %s13, 0
      %p47 = por %p45, %p46
      %p48 = scmp.ne.s32.totalorder %s37, %s40
      %p49 = scmp.eq.s32.totalorder %s18, 1
      %p50 = por %p48, %p49
      %p51 = scmp.ne.s32.totalorder %s40, %s41
      %p52 = scmp.eq.s32.totalorder %s18, 0
      %p53 = por %p51, %p52
      %p54 = scmp.ne.s32.totalorder %s40, %s41
      %p55 = scmp.eq.s32.totalorder %s19, 1
      %p56 = por %p54, %p55
      %p58 = scmp.ne.s32.totalorder %s41, %s57
      %p59 = scmp.eq.s32.totalorder %s19, 0
      %p60 = por %p58, %p59
      %s61 = ssub.s32 %s20, %s32
      %s62 = ssub.s32 %s21, %s28
      %s63 = sor.u32 %s61, %s62
      %p64 = scmp.eq.s32.totalorder %s63, 0
      %s66 = sadd.s32 %s65, 1
      %s67 = scalar_select %p64, %s65, %s66
      %p70 = pneg %p64
      %p71 = scmp.eq.s32.totalorder %s13, 1
      %p72 = por %p70, %p71
      %p73 = scmp.ne.s32.totalorder %s65, %s68
      %p74 = scmp.eq.s32.totalorder %s13, 0
      %p75 = por %p73, %p74
      %p76 = scmp.ne.s32.totalorder %s65, %s68
      %p77 = scmp.eq.s32.totalorder %s18, 1
      %p78 = por %p76, %p77
      %p79 = scmp.ne.s32.totalorder %s68, %s69
      %p80 = scmp.eq.s32.totalorder %s18, 0
      %p81 = por %p79, %p80
      %p82 = scmp.ne.s32.totalorder %s68, %s69
      %p83 = scmp.eq.s32.totalorder %s19, 1
      %p84 = por %p82, %p83
      %p86 = scmp.ne.s32.totalorder %s69, %s85
      %p87 = scmp.eq.s32.totalorder %s19, 0
      %p88 = por %p86, %p87
      %p89 = scmp.le.s32.totalorder 1, %s13
      %p90 = scmp.lt.s32.totalorder %s13, 3
      %p91 = pnand %p89, %p90
      %p92 = pneg %p91
      // Predicated region
      $region9: #{tpu_custom_call.1} parent=5 // pred_check
        _
      $region10: #{tpu_custom_call.1} parent=5 // pred_check_branch
        %94 = sbr.rel (%p91) target = $region12
      $region11: #{tpu_custom_call.1} parent=5 // pred_region
        %s95 = ssub.s32 %s13, 1
      $region12: #{tpu_custom_call.1} parent=5 // pred_fallthru
        _
      %p96 = scmp.lt.s32.totalorder %s13, 2
      // Predicated region
      $region13: #{tpu_custom_call.1} parent=5 // pred_check
        %p97 = pneg %p96
      $region14: #{tpu_custom_call.1} parent=5 // pred_check_branch
        %99 = sbr.rel (%p97) target = $region16
      $region15: #{tpu_custom_call.1} parent=5 // pred_region
        // Predicated region
        $region17: #{tpu_custom_call.1} parent=15 // pred_check
          %p100 = pneg %p47
        $region18: #{tpu_custom_call.1} parent=15 // pred_check_branch
          %102 = sbr.rel (%p100) target = $region20
        $region19: #{tpu_custom_call.1} parent=15 // pred_region
          %s103 = sand.u32 %s37, 1
          %s104 = scalar_lea.sflag [#allocation3], %s103
          %s105 = sand.u32 %s37, 1
          %s106 = smul.addr %s105, 8
          %s107 = scalar_lea.vmem [#allocation2], %s106
          %s109 = ssub.s32 128, 128
          %110 = vsyncadd %s104, %s109
          %s111 = smul.addr %s21, 4
          %s112 = smul.addr %s20, 4
          %s113 = sadd.s32 %s111, %s112
          %s114 = smul.addr %s113, 32
          %s115 = scalar_lea.hbm %s0, %s114
          %s117 = sshll.u32 %s107, 4
          %s118 = int_to_ptr.vmem [resolvable:$true] %s117
          %120 = dma.hbm_to_vmem [thread:$0]  %s115, 128, %s118, %s104
        $region20: #{tpu_custom_call.1} parent=15 // pred_fallthru
          _
      $region16: #{tpu_custom_call.1} parent=5 // pred_fallthru
        _
      %p121 = scmp.le.s32.totalorder 1, %s13
      %p122 = scmp.lt.s32.totalorder %s13, 3
      %p123 = pnand %p121, %p122
      %p124 = pneg %p123
      // Predicated region
      $region21: #{tpu_custom_call.1} parent=5 // pred_check
        _
      $region22: #{tpu_custom_call.1} parent=5 // pred_check_branch
        %126 = sbr.rel (%p123) target = $region24
      $region23: #{tpu_custom_call.1} parent=5 // pred_region
        %s127 = ssub.s32 %s13, 1
        %s128 = sand.u32 %s40, 1
        %s129 = scalar_lea.sflag [#allocation3], %s128
        %s130 = sand.u32 %s40, 1
        %s131 = smul.addr %s130, 8
        %s132 = scalar_lea.vmem [#allocation2], %s131
        // Predicated region
        $region25: #{tpu_custom_call.1} parent=23 // pred_check
          %p133 = pneg %p53
        $region26: #{tpu_custom_call.1} parent=23 // pred_check_branch
          %135 = sbr.rel (%p133) target = $region28
        $region27: #{tpu_custom_call.1} parent=23 // pred_region
          %136 = dma.done %s129, 128
        $region28: #{tpu_custom_call.1} parent=23 // pred_fallthru
          _
        %s137 = sand.u32 %s40, 1
        %s138 = scalar_lea.sflag [#allocation3], %s137
        %s139 = sand.u32 %s40, 1
        %s140 = smul.addr %s139, 8
        %s141 = scalar_lea.vmem [#allocation2], %s140
        %p142 = pneg %p53
        %p143 = pneg %p50
        %p144 = pneg %p81
        %p145 = pneg %p78
        %s146 = sand.u32 %s68, 1
        %s147 = scalar_lea.sflag [#allocation4], %s146
        %s148 = sand.u32 %s68, 1
        %s149 = smul.addr %s148, 16
        %s150 = scalar_lea.vmem [#allocation5], %s149
        %v151 = vld [vmem:[%s132] sm:$0xff]
        %152 = vst [vmem:[%s150] sm:$0xff] %v151
        %v153 = vld [vmem:[%s132] sm:$0xff]
        %s154 = scalar_lea.vmem %s150, 8 [#allocation5]
        %155 = vst [vmem:[%s154] sm:$0xff] %v153
        %s156 = sand.u32 %s68, 1
        %s157 = scalar_lea.sflag [#allocation4], %s156
        %s158 = sand.u32 %s68, 1
        %s159 = smul.addr %s158, 16
        %s160 = scalar_lea.vmem [#allocation5], %s159
        // Predicated region
        $region29: #{tpu_custom_call.1} parent=23 // pred_check
          %p161 = pneg %p78
        $region30: #{tpu_custom_call.1} parent=23 // pred_check_branch
          %163 = sbr.rel (%p161) target = $region32
        $region31: #{tpu_custom_call.1} parent=23 // pred_region
          %s165 = ssub.s32 256, 256
          %166 = vsyncadd %s157, %s165
          %s167 = smul.addr %s23, 4
          %s168 = smul.addr %s22, 8
          %s169 = sadd.s32 %s167, %s168
          %s170 = smul.addr %s169, 32
          %s171 = scalar_lea.hbm %s1, %s170
          %s172 = sshll.u32 %s160, 4
          %s173 = int_to_ptr.vmem [resolvable:$true] %s172
          %178 = dma.vmem_to_hbm [thread:$0]  %s173, 256, %s171, %s157, 128, 128, 8
        $region32: #{tpu_custom_call.1} parent=23 // pred_fallthru
          _
      $region24: #{tpu_custom_call.1} parent=5 // pred_fallthru
        _
      %p179 = scmp.le.s32.totalorder 2, %s13
      // Predicated region
      $region33: #{tpu_custom_call.1} parent=5 // pred_check
        %p180 = pneg %p179
      $region34: #{tpu_custom_call.1} parent=5 // pred_check_branch
        %182 = sbr.rel (%p180) target = $region36
      $region35: #{tpu_custom_call.1} parent=5 // pred_region
        %s183 = ssub.s32 %s13, 2
        // Predicated region
        $region37: #{tpu_custom_call.1} parent=35 // pred_check
          %p184 = pneg %p84
        $region38: #{tpu_custom_call.1} parent=35 // pred_check_branch
          %186 = sbr.rel (%p184) target = $region40
        $region39: #{tpu_custom_call.1} parent=35 // pred_region
          %s187 = sand.u32 %s69, 1
          %s188 = scalar_lea.sflag [#allocation4], %s187
          %s189 = sand.u32 %s69, 1
          %s190 = smul.addr %s189, 16
          %s191 = scalar_lea.vmem [#allocation5], %s190
          %192 = dma.done %s188, 256
        $region40: #{tpu_custom_call.1} parent=35 // pred_fallthru
          _
      $region36: #{tpu_custom_call.1} parent=5 // pred_fallthru
        _
    $region6: #{tpu_custom_call.1} parent=1 // loop_footer
      %s17 = sadd.s32 1, %s13
    $region7: #{tpu_custom_call.1} parent=1 // loop_footer_branch
      %12 = sbr.rel target = $region3
    $region8: #{tpu_custom_call.1} parent=1 // loop_exit
      _
    %193 = vsyncpa [#allocation3], 1
    %s194 = scalar_lea.sflag [#allocation3], 1
    %195 = vsyncpa %s194, 1
    %196 = vsyncpa [#allocation4], 1
    %s197 = scalar_lea.sflag [#allocation4], 1
    %198 = vsyncpa %s197, 1

</llo_original>
